<compile_context>
chip_gen: v7x
topology: tpu7x:2x2x1
jax: 0.10.0
libtpu: 0.0.40
codegen_flags: <defaults>
</compile_context>

<pallas_src>
import jax
import jax.numpy as jnp
from jax.experimental import pallas as pl
from jax.experimental.pallas import tpu as pltpu

# ----- problem sizes (small, consistent with the module) -----
N = 2            # batch
CIN = 248        # ConvTranspose2d in_channels (fixed by the module)
CO = 3           # ConvTranspose2d out_channels
KH = KW = 3
STRIDE = 2
PAD = 2
OUT_PAD = 1
H, W = 7, 9      # small spatial input

OH = (H - 1) * STRIDE - 2 * PAD + KH + OUT_PAD    # 12
OW = (W - 1) * STRIDE - 2 * PAD + KW + OUT_PAD    # 16
HE = H - 1                                        # 6  rows per parity class
WE = W - 1                                        # 8  cols per parity class
M_ROWS = N * HE * WE                              # 96 rows in the fused matmul
NCOL = 4 * CO                                     # 12 = [ee|eo|oe|oo] x CO
TOTAL_PIX = OH * OW                               # 192


def convt_fused_kernel(xa_ref, xb_ref, w_ref, b_ref, o_ref):
    """xa_ref: (N, H, W,   CIN)  original NHWC input
       xb_ref: (N, H, W-1, CIN)  W-shifted copy (x[:, :, 1:, :])
       w_ref : (4, CIN, NCOL)    per-shift lane-packed weights
       b_ref : (1, NCOL)         bias tiled over the 4 parity classes
       o_ref : (N, NCOL)         per-batch, per-parity channel sums"""
    # Slabs for the 4 input shifts (ho, wo) = (1,1), (1,0), (0,1), (0,0).
    # Every W slice starts at sublane 0 (length 8 = one sublane tile).
    slabs = (
        xb_ref[:, 1:1 + HE, :, :],         # x[a+1, b+1]
        xa_ref[:, 1:1 + HE, 0:WE, :],      # x[a+1, b  ]
        xb_ref[:, 0:HE, :, :],             # x[a,   b+1]
        xa_ref[:, 0:HE, 0:WE, :],          # x[a,   b  ]
    )
    acc = jnp.zeros((M_ROWS, NCOL), jnp.float32)
    for i in range(4):
        acc = acc + jnp.dot(slabs[i].reshape(M_ROWS, CIN), w_ref[i],
                            preferred_element_type=jnp.float32)
    y = acc + b_ref[...]                    # (96, 12) conv-transpose outputs
    y = jnp.where(y > 0, y, y * (-0.5))     # where(n1 > 0, n1, -0.5 * n1)
    y = jnp.clip(y, -8.0, 8.0)              # hardtanh(-8, 8)
    # per-batch spatial sums of the 12 lane-packed (parity, channel) columns
    o_ref[...] = jnp.sum(y.reshape(N, HE * WE, NCOL), axis=1)   # (N, 12)


def prepare_params(w_t, b):
    """Hoisted (once per model): regroup ConvTranspose2d weights
       (CIN, CO, KH, KW) into 4 lane-packed (CIN, 12) matrices, one per
       input shift; tile the bias over the 4 parity classes."""
    Wf = w_t.astype(jnp.float32)
    tap = lambda kh, kw: Wf[:, :, kh, kw]          # (CIN, CO)
    z = jnp.zeros((CIN, CO), jnp.float32)
    # columns: [ee | eo | oe | oo]
    Wa = jnp.concatenate([tap(0, 0), tap(0, 1), tap(1, 0), tap(1, 1)], axis=1)  # shift (1,1)
    Wb = jnp.concatenate([tap(0, 2), z,         tap(1, 2), z        ], axis=1)  # shift (1,0)
    Wc = jnp.concatenate([tap(2, 0), tap(2, 1), z,         z        ], axis=1)  # shift (0,1)
    Wd = jnp.concatenate([tap(2, 2), z,         z,         z        ], axis=1)  # shift (0,0)
    w_stack = jnp.stack([Wa, Wb, Wc, Wd], axis=0)                               # (4, 248, 12)
    b_tiled = jnp.tile(b.astype(jnp.float32).reshape(1, CO), (1, 4))            # (1, 12)
    return w_stack, b_tiled


@jax.jit
def model_forward(x_nchw, w_stack, b_tiled):
    """x_nchw: (N, CIN, H, W); w_stack/b_tiled from prepare_params."""
    x = jnp.transpose(x_nchw, (0, 2, 3, 1)).astype(jnp.float32)   # NHWC (N,7,9,248)
    xa = x
    xb = x[:, :, 1:, :]                                           # (N,7,8,248)

    bytes_accessed = 4 * (xa.size + xb.size + w_stack.size + b_tiled.size + N * NCOL)
    sums = pl.pallas_call(
        convt_fused_kernel,
        out_shape=jax.ShapeDtypeStruct((N, NCOL), jnp.float32),
        grid_spec=pltpu.PrefetchScalarGridSpec(
            num_scalar_prefetch=0,
            grid=(1,),
            in_specs=[
                pl.BlockSpec((N, H, W, CIN), lambda i: (0, 0, 0, 0)),
                pl.BlockSpec((N, H, W - 1, CIN), lambda i: (0, 0, 0, 0)),
                pl.BlockSpec((4, CIN, NCOL), lambda i: (0, 0, 0)),
                pl.BlockSpec((1, NCOL), lambda i: (0, 0)),
            ],
            out_specs=pl.BlockSpec((N, NCOL), lambda i: (0, 0)),
        ),
        compiler_params=pltpu.CompilerParams(dimension_semantics=("arbitrary",)),
        cost_estimate=pl.CostEstimate(
            flops=2 * 4 * M_ROWS * CIN * NCOL,
            transcendentals=0,
            bytes_accessed=bytes_accessed),
    )(xa, xb, w_stack, b_tiled)

    # Fold the 4 parity classes + 1/(OH*OW) mean in the jitted wrapper
    # (keeps the non-lane-aligned width-3 slices out of the kernel tail).
    out = (sums[:, 0:CO] + sums[:, CO:2 * CO]
           + sums[:, 2 * CO:3 * CO] + sums[:, 3 * CO:4 * CO]) * (1.0 / TOTAL_PIX)
    return out.reshape(N, CO, 1, 1)                # PyTorch shape (N, CO, 1, 1)


def reference_forward(x_nchw, w_t, b):
    """Pure-JAX reference: conv-transpose as lhs-dilated correlation."""
    x = x_nchw.astype(jnp.float32)
    rhs = jnp.transpose(jnp.flip(w_t, axis=(2, 3)), (1, 0, 2, 3)).astype(jnp.float32)
    y = jax.lax.conv_general_dilated(
        x, rhs, window_strides=(1, 1),
        padding=((KH - 1 - PAD, KH - 1 - PAD + OUT_PAD),
                 (KW - 1 - PAD, KW - 1 - PAD + OUT_PAD)),
        lhs_dilation=(STRIDE, STRIDE),
        dimension_numbers=('NCHW', 'OIHW', 'NCHW'),
        precision=jax.lax.Precision.HIGHEST)
    y = y + b.reshape(1, CO, 1, 1)
    y = jnp.where(y > 0, y, y * (-0.5))
    y = jnp.clip(y, -8.0, 8.0)
    return jnp.mean(y, axis=(2, 3)).reshape(N, CO, 1, 1)


if __name__ == "__main__":
    key = jax.random.PRNGKey(0)
    k1, k2, k3 = jax.random.split(key, 3)
    # deterministic synthetic parameters (PyTorch ConvTranspose2d weight layout)
    w_t = jax.random.normal(k1, (CIN, CO, KH, KW), jnp.float32) * 0.02
    b = jax.random.normal(k2, (CO,), jnp.float32) * 0.02
    x2 = jax.random.normal(k3, (N, CIN, H, W), jnp.float32)

    w_stack, b_tiled = prepare_params(w_t, b)     # hoisted weight prep (once)

    out = model_forward(x2, w_stack, b_tiled)
    out = jax.block_until_ready(out)

    ref = reference_forward(x2, w_t, b)
    assert out.shape == (N, CO, 1, 1)
    assert jnp.allclose(out, ref, rtol=1e-4, atol=1e-4), (out, ref)
    print("KERNEL_OK")
</pallas_src>

<mosaic_0001>
module attributes {stable_mosaic.version = 11 : i64} {
  func.func @convt_fused_kernel(%arg0: i32, %arg1: memref<2x7x9x248xf32, #tpu.memory_space<vmem>>, %arg2: memref<2x7x8x248xf32, #tpu.memory_space<vmem>>, %arg3: memref<4x248x12xf32, #tpu.memory_space<vmem>>, %arg4: memref<1x12xf32, #tpu.memory_space<vmem>>, %arg5: memref<2x12xf32, #tpu.memory_space<vmem>>) attributes {dimension_semantics = [#tpu.dimension_semantics<arbitrary>], iteration_bounds = array<i64: 1>, scalar_prefetch = 0 : i64, scratch_operands = 0 : i64, tpu.core_type = #tpu.core_type<tc>, window_params = [{pipeline_mode = #tpu.pipeline_mode<synchronous>, transform_indices = @transform_0, window_bounds = array<i64: 2, 7, 9, 248>}, {pipeline_mode = #tpu.pipeline_mode<synchronous>, transform_indices = @transform_1, window_bounds = array<i64: 2, 7, 8, 248>}, {pipeline_mode = #tpu.pipeline_mode<synchronous>, transform_indices = @transform_2, window_bounds = array<i64: 4, 248, 12>}, {pipeline_mode = #tpu.pipeline_mode<synchronous>, transform_indices = @transform_3, window_bounds = array<i64: 1, 12>}, {pipeline_mode = #tpu.pipeline_mode<synchronous>, transform_indices = @transform_4, window_bounds = array<i64: 2, 12>}]} {
    %c0 = arith.constant 0 : index
    %c1 = arith.constant 1 : index
    %c0_0 = arith.constant 0 : index
    %c0_1 = arith.constant 0 : index
    %0 = vector.load %arg2[%c0, %c1, %c0_0, %c0_1] : memref<2x7x8x248xf32, #tpu.memory_space<vmem>>, vector<2x6x8x248xf32>
    %c0_2 = arith.constant 0 : index
    %c1_3 = arith.constant 1 : index
    %c0_4 = arith.constant 0 : index
    %c0_5 = arith.constant 0 : index
    %1 = vector.load %arg1[%c0_2, %c1_3, %c0_4, %c0_5] : memref<2x7x9x248xf32, #tpu.memory_space<vmem>>, vector<2x6x8x248xf32>
    %c0_6 = arith.constant 0 : index
    %c0_7 = arith.constant 0 : index
    %c0_8 = arith.constant 0 : index
    %c0_9 = arith.constant 0 : index
    %2 = vector.load %arg2[%c0_6, %c0_7, %c0_8, %c0_9] : memref<2x7x8x248xf32, #tpu.memory_space<vmem>>, vector<2x6x8x248xf32>
    %c0_10 = arith.constant 0 : index
    %c0_11 = arith.constant 0 : index
    %c0_12 = arith.constant 0 : index
    %c0_13 = arith.constant 0 : index
    %3 = vector.load %arg1[%c0_10, %c0_11, %c0_12, %c0_13] : memref<2x7x9x248xf32, #tpu.memory_space<vmem>>, vector<2x6x8x248xf32>
    %cst = arith.constant 0.000000e+00 : f32
    %4 = vector.broadcast %cst : f32 to vector<96x12xf32>
    %5 = vector.shape_cast %0 : vector<2x6x8x248xf32> to vector<96x248xf32>
    %c0_14 = arith.constant 0 : index
    %c0_15 = arith.constant 0 : index
    %c0_16 = arith.constant 0 : index
    %6 = vector.load %arg3[%c0_14, %c0_15, %c0_16] : memref<4x248x12xf32, #tpu.memory_space<vmem>>, vector<1x248x12xf32>
    %7 = vector.shape_cast %6 : vector<1x248x12xf32> to vector<248x12xf32>
    %cst_17 = arith.constant dense<0.000000e+00> : vector<96x12xf32>
    %8 = tpu.matmul %5, %7, %cst_17 {dimension_numbers = #tpu.dot_dimension_numbers<[1], [0], [0], [1], [0, 0, 1, 1], [], []>} : vector<96x248xf32>, vector<248x12xf32>, vector<96x12xf32> -> vector<96x12xf32>
    %9 = arith.addf %4, %8 : vector<96x12xf32>
    %10 = vector.shape_cast %1 : vector<2x6x8x248xf32> to vector<96x248xf32>
    %c1_18 = arith.constant 1 : index
    %c0_19 = arith.constant 0 : index
    %c0_20 = arith.constant 0 : index
    %11 = vector.load %arg3[%c1_18, %c0_19, %c0_20] : memref<4x248x12xf32, #tpu.memory_space<vmem>>, vector<1x248x12xf32>
    %12 = vector.shape_cast %11 : vector<1x248x12xf32> to vector<248x12xf32>
    %cst_21 = arith.constant dense<0.000000e+00> : vector<96x12xf32>
    %13 = tpu.matmul %10, %12, %cst_21 {dimension_numbers = #tpu.dot_dimension_numbers<[1], [0], [0], [1], [0, 0, 1, 1], [], []>} : vector<96x248xf32>, vector<248x12xf32>, vector<96x12xf32> -> vector<96x12xf32>
    %14 = arith.addf %9, %13 : vector<96x12xf32>
    %15 = vector.shape_cast %2 : vector<2x6x8x248xf32> to vector<96x248xf32>
    %c2 = arith.constant 2 : index
    %c0_22 = arith.constant 0 : index
    %c0_23 = arith.constant 0 : index
    %16 = vector.load %arg3[%c2, %c0_22, %c0_23] : memref<4x248x12xf32, #tpu.memory_space<vmem>>, vector<1x248x12xf32>
    %17 = vector.shape_cast %16 : vector<1x248x12xf32> to vector<248x12xf32>
    %cst_24 = arith.constant dense<0.000000e+00> : vector<96x12xf32>
    %18 = tpu.matmul %15, %17, %cst_24 {dimension_numbers = #tpu.dot_dimension_numbers<[1], [0], [0], [1], [0, 0, 1, 1], [], []>} : vector<96x248xf32>, vector<248x12xf32>, vector<96x12xf32> -> vector<96x12xf32>
    %19 = arith.addf %14, %18 : vector<96x12xf32>
    %20 = vector.shape_cast %3 : vector<2x6x8x248xf32> to vector<96x248xf32>
    %c3 = arith.constant 3 : index
    %c0_25 = arith.constant 0 : index
    %c0_26 = arith.constant 0 : index
    %21 = vector.load %arg3[%c3, %c0_25, %c0_26] : memref<4x248x12xf32, #tpu.memory_space<vmem>>, vector<1x248x12xf32>
    %22 = vector.shape_cast %21 : vector<1x248x12xf32> to vector<248x12xf32>
    %cst_27 = arith.constant dense<0.000000e+00> : vector<96x12xf32>
    %23 = tpu.matmul %20, %22, %cst_27 {dimension_numbers = #tpu.dot_dimension_numbers<[1], [0], [0], [1], [0, 0, 1, 1], [], []>} : vector<96x248xf32>, vector<248x12xf32>, vector<96x12xf32> -> vector<96x12xf32>
    %24 = arith.addf %19, %23 : vector<96x12xf32>
    %c0_28 = arith.constant 0 : index
    %c0_29 = arith.constant 0 : index
    %25 = vector.load %arg4[%c0_28, %c0_29] : memref<1x12xf32, #tpu.memory_space<vmem>>, vector<1x12xf32>
    %26 = vector.broadcast %25 : vector<1x12xf32> to vector<96x12xf32>
    %27 = arith.addf %24, %26 : vector<96x12xf32>
    %cst_30 = arith.constant 0.000000e+00 : f32
    %28 = vector.broadcast %cst_30 : f32 to vector<96x12xf32>
    %29 = arith.cmpf ogt, %27, %28 : vector<96x12xf32>
    %cst_31 = arith.constant -5.000000e-01 : f32
    %30 = vector.broadcast %cst_31 : f32 to vector<96x12xf32>
    %31 = arith.mulf %27, %30 : vector<96x12xf32>
    %32 = arith.select %29, %27, %31 : vector<96x12xi1>, vector<96x12xf32>
    %cst_32 = arith.constant -8.000000e+00 : f32
    %cst_33 = arith.constant 8.000000e+00 : f32
    %33 = vector.broadcast %cst_32 : f32 to vector<96x12xf32>
    %34 = arith.maximumf %33, %32 : vector<96x12xf32>
    %35 = vector.broadcast %cst_33 : f32 to vector<96x12xf32>
    %36 = arith.minimumf %35, %34 : vector<96x12xf32>
    %37 = vector.shape_cast %36 : vector<96x12xf32> to vector<2x48x12xf32>
    %cst_34 = arith.constant dense<0.000000e+00> : vector<2x12xf32>
    %38 = vector.multi_reduction <add>, %37, %cst_34 [1] : vector<2x48x12xf32> to vector<2x12xf32>
    %c0_35 = arith.constant 0 : index
    %c0_36 = arith.constant 0 : index
    %39 = vector.load %arg5[%c0_35, %c0_36] : memref<2x12xf32, #tpu.memory_space<vmem>>, vector<2x12xf32>
    tpu.vector_store %arg5[%c0_35, %c0_36], %38 {strides = array<i32>} : memref<2x12xf32, #tpu.memory_space<vmem>>, vector<2x12xf32>,
    return
  }
  func.func @transform_0(%arg0: i32) -> (i32, i32, i32, i32) {
    %c0_i32 = arith.constant 0 : i32
    %c0_i32_0 = arith.constant 0 : i32
    %c0_i32_1 = arith.constant 0 : i32
    %c0_i32_2 = arith.constant 0 : i32
    %c0_i32_3 = arith.constant 0 : i32
    return %c0_i32, %c0_i32_0, %c0_i32_1, %c0_i32_2 : i32, i32, i32, i32
  }
  func.func @transform_1(%arg0: i32) -> (i32, i32, i32, i32) {
    %c0_i32 = arith.constant 0 : i32
    %c0_i32_0 = arith.constant 0 : i32
    %c0_i32_1 = arith.constant 0 : i32
    %c0_i32_2 = arith.constant 0 : i32
    %c0_i32_3 = arith.constant 0 : i32
    return %c0_i32, %c0_i32_0, %c0_i32_1, %c0_i32_2 : i32, i32, i32, i32
  }
  func.func @transform_2(%arg0: i32) -> (i32, i32, i32) {
    %c0_i32 = arith.constant 0 : i32
    %c0_i32_0 = arith.constant 0 : i32
    %c0_i32_1 = arith.constant 0 : i32
    %c0_i32_2 = arith.constant 0 : i32
    return %c0_i32, %c0_i32_0, %c0_i32_1 : i32, i32, i32
  }
  func.func @transform_3(%arg0: i32) -> (i32, i32) {
    %c0_i32 = arith.constant 0 : i32
    %c0_i32_0 = arith.constant 0 : i32
    %c0_i32_1 = arith.constant 0 : i32
    return %c0_i32, %c0_i32_0 : i32, i32
  }
  func.func @transform_4(%arg0: i32) -> (i32, i32) {
    %c0_i32 = arith.constant 0 : i32
    %c0_i32_0 = arith.constant 0 : i32
    %c0_i32_1 = arith.constant 0 : i32
    return %c0_i32, %c0_i32_0 : i32, i32
  }
}

</mosaic_0001>

<llo_original>
// kernel: model_forward.1
$region0: #{model_forward.1}
  #allocation0 [shape = 'u32[]', space=smem, size = 0x4, offset = 0x4, fixed_abs, tag = 'smem constant byte address 0x4 - core index']
  #allocation1 [shape = 'u32[144,128]{1,0:T(1,128)}', space=vmem, size = 0x12000, scoped, tag = 'internal scratch']
  %s0 = inlined_call_operand.vmem [shape: f32[2,7,9,248], index: 0, kind: input, shape index: {}]
  %s1 = inlined_call_operand.vmem [shape: f32[2,7,8,248], index: 1, kind: input, shape index: {}]
  %s2 = inlined_call_operand.vmem [shape: f32[4,248,12], index: 2, kind: input, shape index: {}]
  %s3 = inlined_call_operand.vmem [shape: f32[1,12], index: 3, kind: input, shape index: {}]
  %s4 = inlined_call_operand.vmem [shape: f32[2,12], index: 4, kind: output, shape index: {}]
  %s5 = sld [smem:[#allocation0]]
  $region26: #{model_forward.1} parent=0
    _
  %s7 = ssub.s32 1, %s5
  %s8 = scalar_select 0, %s7, %s5
  // Predicated region
  $region2: #{model_forward.1} parent=0 // pred_check
    _
  $region3: #{model_forward.1} parent=0 // pred_check_branch
    %10 = sbr.rel (0) target = $region5
  $region4: #{model_forward.1} parent=0 // pred_region
    _
  $region5: #{model_forward.1} parent=0 // pred_fallthru
    _
  // Predicated region
  $region6: #{model_forward.1} parent=0 // pred_check
    _
  $region7: #{model_forward.1} parent=0 // pred_check_branch
    %12 = sbr.rel (0) target = $region9
  $region8: #{model_forward.1} parent=0 // pred_region
    _
  $region9: #{model_forward.1} parent=0 // pred_fallthru
    _
  // Predicated region
  $region10: #{model_forward.1} parent=0 // pred_check
    _
  $region11: #{model_forward.1} parent=0 // pred_check_branch
    %14 = sbr.rel (0) target = $region13
  $region12: #{model_forward.1} parent=0 // pred_region
    _
  $region13: #{model_forward.1} parent=0 // pred_fallthru
    _
  // Predicated region
  $region14: #{model_forward.1} parent=0 // pred_check
    _
  $region15: #{model_forward.1} parent=0 // pred_check_branch
    %16 = sbr.rel (0) target = $region17
  $region16: #{model_forward.1} parent=0 // pred_region
    _
  $region17: #{model_forward.1} parent=0 // pred_fallthru
    _
  %s17 = scalar_lea.vmem %s1, 16
  %v18 = vld [vmem:[%s17] sm:$0xff]
  %v19 = vld [vmem:[%s17 + $0x8] sm:$0xff]
  %v20 = vld [vmem:[%s17 + $0x10] sm:$0xff]
  %v21 = vld [vmem:[%s17 + $0x18] sm:$0xff]
  %v22 = vld [vmem:[%s17 + $0x20] sm:$0xff]
  %v23 = vld [vmem:[%s17 + $0x28] sm:$0xff]
  %v24 = vld [vmem:[%s17 + $0x30] sm:$0xff]
  %v25 = vld [vmem:[%s17 + $0x38] sm:$0xff]
  %v26 = vld [vmem:[%s17 + $0x40] sm:$0xff]
  %v27 = vld [vmem:[%s17 + $0x48] sm:$0xff]
  %v28 = vld [vmem:[%s17 + $0x50] sm:$0xff]
  %v29 = vld [vmem:[%s17 + $0x58] sm:$0xff]
  %v30 = vld [vmem:[%s17 + $0x70] sm:$0xff]
  %v31 = vld [vmem:[%s17 + $0x78] sm:$0xff]
  %v32 = vld [vmem:[%s17 + $0x80] sm:$0xff]
  %v33 = vld [vmem:[%s17 + $0x88] sm:$0xff]
  %v34 = vld [vmem:[%s17 + $0x90] sm:$0xff]
  %v35 = vld [vmem:[%s17 + $0x98] sm:$0xff]
  %v36 = vld [vmem:[%s17 + $0xa0] sm:$0xff]
  %v37 = vld [vmem:[%s17 + $0xa8] sm:$0xff]
  %v38 = vld [vmem:[%s17 + $0xb0] sm:$0xff]
  %v39 = vld [vmem:[%s17 + $0xb8] sm:$0xff]
  %v40 = vld [vmem:[%s17 + $0xc0] sm:$0xff]
  %v41 = vld [vmem:[%s17 + $0xc8] sm:$0xff]
  %s42 = scalar_lea.vmem %s0, 32
  %v43 = vld [vmem:[%s42] sm:$0xff]
  %v44 = vld [vmem:[%s42 + $0x8] sm:$0xff]
  %v45 = vld [vmem:[%s42 + $0x20] sm:$0xff]
  %v46 = vld [vmem:[%s42 + $0x28] sm:$0xff]
  %v47 = vld [vmem:[%s42 + $0x40] sm:$0xff]
  %v48 = vld [vmem:[%s42 + $0x48] sm:$0xff]
  %v49 = vld [vmem:[%s42 + $0x60] sm:$0xff]
  %v50 = vld [vmem:[%s42 + $0x68] sm:$0xff]
  %v51 = vld [vmem:[%s42 + $0x80] sm:$0xff]
  %v52 = vld [vmem:[%s42 + $0x88] sm:$0xff]
  %v53 = vld [vmem:[%s42 + $0xa0] sm:$0xff]
  %v54 = vld [vmem:[%s42 + $0xa8] sm:$0xff]
  %v55 = vld [vmem:[%s42 + $0xe0] sm:$0xff]
  %v56 = vld [vmem:[%s42 + $0xe8] sm:$0xff]
  %v57 = vld [vmem:[%s42 + $0x100] sm:$0xff]
  %v58 = vld [vmem:[%s42 + $0x108] sm:$0xff]
  %v59 = vld [vmem:[%s42 + $0x120] sm:$0xff]
  %v60 = vld [vmem:[%s42 + $0x128] sm:$0xff]
  %v61 = vld [vmem:[%s42 + $0x140] sm:$0xff]
  %v62 = vld [vmem:[%s42 + $0x148] sm:$0xff]
  %v63 = vld [vmem:[%s42 + $0x160] sm:$0xff]
  %v64 = vld [vmem:[%s42 + $0x168] sm:$0xff]
  %v65 = vld [vmem:[%s42 + $0x180] sm:$0xff]
  %v66 = vld [vmem:[%s42 + $0x188] sm:$0xff]
  %v67 = vld [vmem:[%s1] sm:$0xff]
  %v68 = vld [vmem:[%s1 + $0x8] sm:$0xff]
  %v69 = vld [vmem:[%s1 + $0x10] sm:$0xff]
  %v70 = vld [vmem:[%s1 + $0x18] sm:$0xff]
  %v71 = vld [vmem:[%s1 + $0x20] sm:$0xff]
  %v72 = vld [vmem:[%s1 + $0x28] sm:$0xff]
  %v73 = vld [vmem:[%s1 + $0x30] sm:$0xff]
  %v74 = vld [vmem:[%s1 + $0x38] sm:$0xff]
  %v75 = vld [vmem:[%s1 + $0x40] sm:$0xff]
  %v76 = vld [vmem:[%s1 + $0x48] sm:$0xff]
  %v77 = vld [vmem:[%s1 + $0x50] sm:$0xff]
  %v78 = vld [vmem:[%s1 + $0x58] sm:$0xff]
  %v79 = vld [vmem:[%s1 + $0x70] sm:$0xff]
  %v80 = vld [vmem:[%s1 + $0x78] sm:$0xff]
  %v81 = vld [vmem:[%s1 + $0x80] sm:$0xff]
  %v82 = vld [vmem:[%s1 + $0x88] sm:$0xff]
  %v83 = vld [vmem:[%s1 + $0x90] sm:$0xff]
  %v84 = vld [vmem:[%s1 + $0x98] sm:$0xff]
  %v85 = vld [vmem:[%s1 + $0xa0] sm:$0xff]
  %v86 = vld [vmem:[%s1 + $0xa8] sm:$0xff]
  %v87 = vld [vmem:[%s1 + $0xb0] sm:$0xff]
  %v88 = vld [vmem:[%s1 + $0xb8] sm:$0xff]
  %v89 = vld [vmem:[%s1 + $0xc0] sm:$0xff]
  %v90 = vld [vmem:[%s1 + $0xc8] sm:$0xff]
  %v91 = vld [vmem:[%s0] sm:$0xff]
  %v92 = vld [vmem:[%s0 + $0x8] sm:$0xff]
  %v93 = vld [vmem:[%s0 + $0x20] sm:$0xff]
  %v94 = vld [vmem:[%s0 + $0x28] sm:$0xff]
  %v95 = vld [vmem:[%s0 + $0x40] sm:$0xff]
  %v96 = vld [vmem:[%s0 + $0x48] sm:$0xff]
  %v97 = vld [vmem:[%s0 + $0x60] sm:$0xff]
  %v98 = vld [vmem:[%s0 + $0x68] sm:$0xff]
  %v99 = vld [vmem:[%s0 + $0x80] sm:$0xff]
  %v100 = vld [vmem:[%s0 + $0x88] sm:$0xff]
  %v101 = vld [vmem:[%s0 + $0xa0] sm:$0xff]
  %v102 = vld [vmem:[%s0 + $0xa8] sm:$0xff]
  %v103 = vld [vmem:[%s0 + $0xe0] sm:$0xff]
  %v104 = vld [vmem:[%s0 + $0xe8] sm:$0xff]
  %v105 = vld [vmem:[%s0 + $0x100] sm:$0xff]
  %v106 = vld [vmem:[%s0 + $0x108] sm:$0xff]
  %v107 = vld [vmem:[%s0 + $0x120] sm:$0xff]
  %v108 = vld [vmem:[%s0 + $0x128] sm:$0xff]
  %v109 = vld [vmem:[%s0 + $0x140] sm:$0xff]
  %v110 = vld [vmem:[%s0 + $0x148] sm:$0xff]
  %v111 = vld [vmem:[%s0 + $0x160] sm:$0xff]
  %v112 = vld [vmem:[%s0 + $0x168] sm:$0xff]
  %v113 = vld [vmem:[%s0 + $0x180] sm:$0xff]
  %v114 = vld [vmem:[%s0 + $0x188] sm:$0xff]
  %v115 = vld [vmem:[%s2] sm:$0xff]
  %v116 = vld [vmem:[%s2 + $0x8] sm:$0xff]
  %v117 = vld [vmem:[%s2 + $0x10] sm:$0xff]
  %v118 = vld [vmem:[%s2 + $0x18] sm:$0xff]
  %v119 = vld [vmem:[%s2 + $0x20] sm:$0xff]
  %v120 = vld [vmem:[%s2 + $0x28] sm:$0xff]
  %v121 = vld [vmem:[%s2 + $0x30] sm:$0xff]
  %v122 = vld [vmem:[%s2 + $0x38] sm:$0xff]
  %v123 = vld [vmem:[%s2 + $0x40] sm:$0xff]
  %v124 = vld [vmem:[%s2 + $0x48] sm:$0xff]
  %v125 = vld [vmem:[%s2 + $0x50] sm:$0xff]
  %v126 = vld [vmem:[%s2 + $0x58] sm:$0xff]
  %v127 = vld [vmem:[%s2 + $0x60] sm:$0xff]
  %v128 = vld [vmem:[%s2 + $0x68] sm:$0xff]
  %v129 = vld [vmem:[%s2 + $0x70] sm:$0xff]
  %v130 = vld [vmem:[%s2 + $0x78] sm:$0xff]
  %v131 = vld [vmem:[%s2 + $0x80] sm:$0xff]
  %v132 = vld [vmem:[%s2 + $0x88] sm:$0xff]
  %v133 = vld [vmem:[%s2 + $0x90] sm:$0xff]
  %v134 = vld [vmem:[%s2 + $0x98] sm:$0xff]
  %v135 = vld [vmem:[%s2 + $0xa0] sm:$0xff]
  %v136 = vld [vmem:[%s2 + $0xa8] sm:$0xff]
  %v137 = vld [vmem:[%s2 + $0xb0] sm:$0xff]
  %v138 = vld [vmem:[%s2 + $0xb8] sm:$0xff]
  %v139 = vld [vmem:[%s2 + $0xc0] sm:$0xff]
  %v140 = vld [vmem:[%s2 + $0xc8] sm:$0xff]
  %v141 = vld [vmem:[%s2 + $0xd0] sm:$0xff]
  %v142 = vld [vmem:[%s2 + $0xd8] sm:$0xff]
  %v143 = vld [vmem:[%s2 + $0xe0] sm:$0xff]
  %v144 = vld [vmem:[%s2 + $0xe8] sm:$0xff]
  %v145 = vld [vmem:[%s2 + $0xf0] sm:$0xff]
  %s146 = scalar_lea.vmem %s2, 248
  %v147 = vld [vmem:[%s146] sm:$0xff]
  %v148 = vld [vmem:[%s146 + $0x8] sm:$0xff]
  %v149 = vld [vmem:[%s146 + $0x10] sm:$0xff]
  %v150 = vld [vmem:[%s146 + $0x18] sm:$0xff]
  %v151 = vld [vmem:[%s146 + $0x20] sm:$0xff]
  %v152 = vld [vmem:[%s146 + $0x28] sm:$0xff]
  %v153 = vld [vmem:[%s146 + $0x30] sm:$0xff]
  %v154 = vld [vmem:[%s146 + $0x38] sm:$0xff]
  %v155 = vld [vmem:[%s146 + $0x40] sm:$0xff]
  %v156 = vld [vmem:[%s146 + $0x48] sm:$0xff]
  %v157 = vld [vmem:[%s146 + $0x50] sm:$0xff]
  %v158 = vld [vmem:[%s146 + $0x58] sm:$0xff]
  %v159 = vld [vmem:[%s146 + $0x60] sm:$0xff]
  %v160 = vld [vmem:[%s146 + $0x68] sm:$0xff]
  %v161 = vld [vmem:[%s146 + $0x70] sm:$0xff]
  %v162 = vld [vmem:[%s146 + $0x78] sm:$0xff]
  %v163 = vld [vmem:[%s146 + $0x80] sm:$0xff]
  %v164 = vld [vmem:[%s146 + $0x88] sm:$0xff]
  %v165 = vld [vmem:[%s146 + $0x90] sm:$0xff]
  %v166 = vld [vmem:[%s146 + $0x98] sm:$0xff]
  %v167 = vld [vmem:[%s146 + $0xa0] sm:$0xff]
  %v168 = vld [vmem:[%s146 + $0xa8] sm:$0xff]
  %v169 = vld [vmem:[%s146 + $0xb0] sm:$0xff]
  %v170 = vld [vmem:[%s146 + $0xb8] sm:$0xff]
  %v171 = vld [vmem:[%s146 + $0xc0] sm:$0xff]
  %v172 = vld [vmem:[%s146 + $0xc8] sm:$0xff]
  %v173 = vld [vmem:[%s146 + $0xd0] sm:$0xff]
  %v174 = vld [vmem:[%s146 + $0xd8] sm:$0xff]
  %v175 = vld [vmem:[%s146 + $0xe0] sm:$0xff]
  %v176 = vld [vmem:[%s146 + $0xe8] sm:$0xff]
  %v177 = vld [vmem:[%s146 + $0xf0] sm:$0xff]
  %vm178 = vcmask 982016
  %v180 = vsel %vm178, %v44, 0
  %v183 = vsel %vm178, %v46, 0
  %v186 = vsel %vm178, %v48, 0
  %v189 = vsel %vm178, %v50, 0
  %v192 = vsel %vm178, %v52, 0
  %v195 = vsel %vm178, %v54, 0
  %v198 = vsel %vm178, %v56, 0
  %v201 = vsel %vm178, %v58, 0
  %v204 = vsel %vm178, %v60, 0
  %v207 = vsel %vm178, %v62, 0
  %v210 = vsel %vm178, %v64, 0
  %v213 = vsel %vm178, %v66, 0
  %215 = vmatprep.subr.mxu0 0.0
  %216 = vmatpush1.msra.mxu0 %v147
  %217 = vmatprep.subr.mxu0 0.0
  %218 = vmatpush1.msra.mxu0 %v148
  %219 = vmatprep.subr.mxu0 0.0
  %220 = vmatpush1.msra.mxu0 %v149
  %221 = vmatprep.subr.mxu0 0.0
  %222 = vmatpush1.msra.mxu0 %v150
  %223 = vmatprep.subr.mxu0 0.0
  %224 = vmatpush1.msra.mxu0 %v151
  %225 = vmatprep.subr.mxu0 0.0
  %226 = vmatpush1.msra.mxu0 %v152
  %227 = vmatprep.subr.mxu0 0.0
  %228 = vmatpush1.msra.mxu0 %v153
  %229 = vmatprep.subr.mxu0 0.0
  %230 = vmatpush1.msra.mxu0 %v154
  %231 = vmatprep.subr.mxu0 0.0
  %232 = vmatpush1.msra.mxu0 %v155
  %233 = vmatprep.subr.mxu0 0.0
  %234 = vmatpush1.msra.mxu0 %v156
  %235 = vmatprep.subr.mxu0 0.0
  %236 = vmatpush1.msra.mxu0 %v157
  %237 = vmatprep.subr.mxu0 0.0
  %238 = vmatpush1.msra.mxu0 %v158
  %239 = vmatprep.subr.mxu0 0.0
  %240 = vmatpush1.msra.mxu0 %v159
  %241 = vmatprep.subr.mxu0 0.0
  %242 = vmatpush1.msra.mxu0 %v160
  %243 = vmatprep.subr.mxu0 0.0
  %244 = vmatpush1.msra.mxu0 %v161
  %245 = vmatprep.subr.mxu0 0.0
  %246 = vmatpush1.msra.mxu0 %v162
  %247 = vmatprep.subr.mxu0 0.0
  %248 = vmatpush1.msra.mxu0 %v163
  %249 = vmatprep.subr.mxu0 0.0
  %250 = vmatpush1.msra.mxu0 %v164
  %251 = vmatprep.subr.mxu0 0.0
  %252 = vmatpush1.msra.mxu0 %v165
  %253 = vmatprep.subr.mxu0 0.0
  %254 = vmatpush1.msra.mxu0 %v166
  %255 = vmatprep.subr.mxu0 0.0
  %256 = vmatpush1.msra.mxu0 %v167
  %257 = vmatprep.subr.mxu0 0.0
  %258 = vmatpush1.msra.mxu0 %v168
  %259 = vmatprep.subr.mxu0 0.0
  %260 = vmatpush1.msra.mxu0 %v169
  %261 = vmatprep.subr.mxu0 0.0
  %262 = vmatpush1.msra.mxu0 %v170
  %263 = vmatprep.subr.mxu0 0.0
  %264 = vmatpush1.msra.mxu0 %v171
  %265 = vmatprep.subr.mxu0 0.0
  %266 = vmatpush1.msra.mxu0 %v172
  %267 = vmatprep.subr.mxu0 0.0
  %268 = vmatpush1.msra.mxu0 %v173
  %269 = vmatprep.subr.mxu0 0.0
  %270 = vmatpush1.msra.mxu0 %v174
  %271 = vmatprep.subr.mxu0 0.0
  %272 = vmatpush1.msra.mxu0 %v175
  %273 = vmatprep.subr.mxu0 0.0
  %274 = vmatpush1.msra.mxu0 %v176
  %275 = vmatprep.subr.mxu0 0.0
  %276 = vmatpush1.msra.mxu0 %v177
  %277 = vmatprep.subr.mxu0 0.0
  %278 = vmatpush1.msra.mxu0 0.0
  %279 = vmatprep.mubr.f32.mxu0 %v180
  %280 = vmatmul.mubr.f32.gmra.mrb[0].mxu0 %v43
  %v281 = vpop.f32.mrb[0].mxu0
  %v282 = vadd.f32 0.0, %v281
  %v283 = vpop.f32.mrb[0].mxu0
  %284 = vmatprep.mubr.f32.mxu0 %v183
  %285 = vmatmul.mubr.f32.gmra.mrb[0].mxu0 %v45
  %v286 = vpop.f32.mrb[0].mxu0
  %v287 = vadd.f32 0.0, %v286
  %v288 = vpop.f32.mrb[0].mxu0
  %289 = vmatprep.mubr.f32.mxu0 %v186
  %290 = vmatmul.mubr.f32.gmra.mrb[0].mxu0 %v47
  %v291 = vpop.f32.mrb[0].mxu0
  %v292 = vadd.f32 0.0, %v291
  %v293 = vpop.f32.mrb[0].mxu0
  %294 = vmatprep.mubr.f32.mxu0 %v189
  %295 = vmatmul.mubr.f32.gmra.mrb[0].mxu0 %v49
  %v296 = vpop.f32.mrb[0].mxu0
  %v297 = vadd.f32 0.0, %v296
  %v298 = vpop.f32.mrb[0].mxu0
  %299 = vmatprep.mubr.f32.mxu0 %v192
  %300 = vmatmul.mubr.f32.gmra.mrb[0].mxu0 %v51
  %v301 = vpop.f32.mrb[0].mxu0
  %v302 = vadd.f32 0.0, %v301
  %v303 = vpop.f32.mrb[0].mxu0
  %304 = vmatprep.mubr.f32.mxu0 %v195
  %305 = vmatmul.mubr.f32.gmra.mrb[0].mxu0 %v53
  %v306 = vpop.f32.mrb[0].mxu0
  %v307 = vadd.f32 0.0, %v306
  %v308 = vpop.f32.mrb[0].mxu0
  %309 = vmatprep.mubr.f32.mxu0 %v198
  %310 = vmatmul.mubr.f32.gmra.mrb[0].mxu0 %v55
  %v311 = vpop.f32.mrb[0].mxu0
  %v312 = vadd.f32 0.0, %v311
  %v313 = vpop.f32.mrb[0].mxu0
  %314 = vmatprep.mubr.f32.mxu0 %v201
  %315 = vmatmul.mubr.f32.gmra.mrb[0].mxu0 %v57
  %v316 = vpop.f32.mrb[0].mxu0
  %v317 = vadd.f32 0.0, %v316
  %v318 = vpop.f32.mrb[0].mxu0
  %319 = vmatprep.mubr.f32.mxu0 %v204
  %320 = vmatmul.mubr.f32.gmra.mrb[0].mxu0 %v59
  %v321 = vpop.f32.mrb[0].mxu0
  %v322 = vadd.f32 0.0, %v321
  %v323 = vpop.f32.mrb[0].mxu0
  %324 = vmatprep.mubr.f32.mxu0 %v207
  %325 = vmatmul.mubr.f32.gmra.mrb[0].mxu0 %v61
  %v326 = vpop.f32.mrb[0].mxu0
  %v327 = vadd.f32 0.0, %v326
  %v328 = vpop.f32.mrb[0].mxu0
  %329 = vmatprep.mubr.f32.mxu0 %v210
  %330 = vmatmul.mubr.f32.gmra.mrb[0].mxu0 %v63
  %v331 = vpop.f32.mrb[0].mxu0
  %v332 = vadd.f32 0.0, %v331
  %v333 = vpop.f32.mrb[0].mxu0
  %334 = vmatprep.mubr.f32.mxu0 %v213
  %335 = vmatmul.mubr.f32.gmra.mrb[0].mxu0 %v65
  %v336 = vpop.f32.mrb[0].mxu0
  %v337 = vadd.f32 0.0, %v336
  %v338 = vpop.f32.mrb[0].mxu0
  %339 = vdwg.mxu0
  %v341 = vsel %vm178, %v19, 0
  %v344 = vsel %vm178, %v21, 0
  %v347 = vsel %vm178, %v23, 0
  %v350 = vsel %vm178, %v25, 0
  %v353 = vsel %vm178, %v27, 0
  %v356 = vsel %vm178, %v29, 0
  %v359 = vsel %vm178, %v31, 0
  %v362 = vsel %vm178, %v33, 0
  %v365 = vsel %vm178, %v35, 0
  %v368 = vsel %vm178, %v37, 0
  %v371 = vsel %vm178, %v39, 0
  %v374 = vsel %vm178, %v41, 0
  %376 = vmatprep.subr.mxu0 0.0
  %377 = vmatpush1.msra.mxu0 %v115
  %378 = vmatprep.subr.mxu0 0.0
  %379 = vmatpush1.msra.mxu0 %v116
  %380 = vmatprep.subr.mxu0 0.0
  %381 = vmatpush1.msra.mxu0 %v117
  %382 = vmatprep.subr.mxu0 0.0
  %383 = vmatpush1.msra.mxu0 %v118
  %384 = vmatprep.subr.mxu0 0.0
  %385 = vmatpush1.msra.mxu0 %v119
  %386 = vmatprep.subr.mxu0 0.0
  %387 = vmatpush1.msra.mxu0 %v120
  %388 = vmatprep.subr.mxu0 0.0
  %389 = vmatpush1.msra.mxu0 %v121
  %390 = vmatprep.subr.mxu0 0.0
  %391 = vmatpush1.msra.mxu0 %v122
  %392 = vmatprep.subr.mxu0 0.0
  %393 = vmatpush1.msra.mxu0 %v123
  %394 = vmatprep.subr.mxu0 0.0
  %395 = vmatpush1.msra.mxu0 %v124
  %396 = vmatprep.subr.mxu0 0.0
  %397 = vmatpush1.msra.mxu0 %v125
  %398 = vmatprep.subr.mxu0 0.0
  %399 = vmatpush1.msra.mxu0 %v126
  %400 = vmatprep.subr.mxu0 0.0
  %401 = vmatpush1.msra.mxu0 %v127
  %402 = vmatprep.subr.mxu0 0.0
  %403 = vmatpush1.msra.mxu0 %v128
  %404 = vmatprep.subr.mxu0 0.0
  %405 = vmatpush1.msra.mxu0 %v129
  %406 = vmatprep.subr.mxu0 0.0
  %407 = vmatpush1.msra.mxu0 %v130
  %408 = vmatprep.subr.mxu0 0.0
  %409 = vmatpush1.msra.mxu0 %v131
  %410 = vmatprep.subr.mxu0 0.0
  %411 = vmatpush1.msra.mxu0 %v132
  %412 = vmatprep.subr.mxu0 0.0
  %413 = vmatpush1.msra.mxu0 %v133
  %414 = vmatprep.subr.mxu0 0.0
  %415 = vmatpush1.msra.mxu0 %v134
  %416 = vmatprep.subr.mxu0 0.0
  %417 = vmatpush1.msra.mxu0 %v135
  %418 = vmatprep.subr.mxu0 0.0
  %419 = vmatpush1.msra.mxu0 %v136
  %420 = vmatprep.subr.mxu0 0.0
  %421 = vmatpush1.msra.mxu0 %v137
  %422 = vmatprep.subr.mxu0 0.0
  %423 = vmatpush1.msra.mxu0 %v138
  %424 = vmatprep.subr.mxu0 0.0
  %425 = vmatpush1.msra.mxu0 %v139
  %426 = vmatprep.subr.mxu0 0.0
  %427 = vmatpush1.msra.mxu0 %v140
  %428 = vmatprep.subr.mxu0 0.0
  %429 = vmatpush1.msra.mxu0 %v141
  %430 = vmatprep.subr.mxu0 0.0
  %431 = vmatpush1.msra.mxu0 %v142
  %432 = vmatprep.subr.mxu0 0.0
  %433 = vmatpush1.msra.mxu0 %v143
  %434 = vmatprep.subr.mxu0 0.0
  %435 = vmatpush1.msra.mxu0 %v144
  %436 = vmatprep.subr.mxu0 0.0
  %437 = vmatpush1.msra.mxu0 %v145
  %438 = vmatprep.subr.mxu0 0.0
  %439 = vmatpush1.msra.mxu0 0.0
  %440 = vmatprep.mubr.f32.mxu0 %v341
  %441 = vmatmul.mubr.f32.gmra.mrb[0].mxu0 %v18
  %v442 = vpop.f32.mrb[0].mxu0
  %v443 = vadd.f32 %v282, %v442
  %v444 = vpop.f32.mrb[0].mxu0
  %445 = vmatprep.mubr.f32.mxu0 %v344
  %446 = vmatmul.mubr.f32.gmra.mrb[0].mxu0 %v20
  %v447 = vpop.f32.mrb[0].mxu0
  %v448 = vadd.f32 %v287, %v447
  %v449 = vpop.f32.mrb[0].mxu0
  %450 = vmatprep.mubr.f32.mxu0 %v347
  %451 = vmatmul.mubr.f32.gmra.mrb[0].mxu0 %v22
  %v452 = vpop.f32.mrb[0].mxu0
  %v453 = vadd.f32 %v292, %v452
  %v454 = vpop.f32.mrb[0].mxu0
  %455 = vmatprep.mubr.f32.mxu0 %v350
  %456 = vmatmul.mubr.f32.gmra.mrb[0].mxu0 %v24
  %v457 = vpop.f32.mrb[0].mxu0
  %v458 = vadd.f32 %v297, %v457
  %v459 = vpop.f32.mrb[0].mxu0
  %460 = vmatprep.mubr.f32.mxu0 %v353
  %461 = vmatmul.mubr.f32.gmra.mrb[0].mxu0 %v26
  %v462 = vpop.f32.mrb[0].mxu0
  %v463 = vadd.f32 %v302, %v462
  %v464 = vpop.f32.mrb[0].mxu0
  %465 = vmatprep.mubr.f32.mxu0 %v356
  %466 = vmatmul.mubr.f32.gmra.mrb[0].mxu0 %v28
  %v467 = vpop.f32.mrb[0].mxu0
  %v468 = vadd.f32 %v307, %v467
  %v469 = vpop.f32.mrb[0].mxu0
  %470 = vmatprep.mubr.f32.mxu0 %v359
  %471 = vmatmul.mubr.f32.gmra.mrb[0].mxu0 %v30
  %v472 = vpop.f32.mrb[0].mxu0
  %v473 = vadd.f32 %v312, %v472
  %v474 = vpop.f32.mrb[0].mxu0
  %475 = vmatprep.mubr.f32.mxu0 %v362
  %476 = vmatmul.mubr.f32.gmra.mrb[0].mxu0 %v32
  %v477 = vpop.f32.mrb[0].mxu0
  %v478 = vadd.f32 %v317, %v477
  %v479 = vpop.f32.mrb[0].mxu0
  %480 = vmatprep.mubr.f32.mxu0 %v365
  %481 = vmatmul.mubr.f32.gmra.mrb[0].mxu0 %v34
  %v482 = vpop.f32.mrb[0].mxu0
  %v483 = vadd.f32 %v322, %v482
  %v484 = vpop.f32.mrb[0].mxu0
  %485 = vmatprep.mubr.f32.mxu0 %v368
  %486 = vmatmul.mubr.f32.gmra.mrb[0].mxu0 %v36
  %v487 = vpop.f32.mrb[0].mxu0
  %v488 = vadd.f32 %v327, %v487
  %v489 = vpop.f32.mrb[0].mxu0
  %490 = vmatprep.mubr.f32.mxu0 %v371
  %491 = vmatmul.mubr.f32.gmra.mrb[0].mxu0 %v38
  %v492 = vpop.f32.mrb[0].mxu0
  %v493 = vadd.f32 %v332, %v492
  %v494 = vpop.f32.mrb[0].mxu0
  %495 = vmatprep.mubr.f32.mxu0 %v374
  %496 = vmatmul.mubr.f32.gmra.mrb[0].mxu0 %v40
  %v497 = vpop.f32.mrb[0].mxu0
  %v498 = vadd.f32 %v337, %v497
  %v499 = vpop.f32.mrb[0].mxu0
  %500 = vdwg.mxu0
  %s501 = scalar_lea.vmem %s2, 496
  %v502 = vld [vmem:[%s501] sm:$0xff]
  %v503 = vld [vmem:[%s501 + $0x8] sm:$0xff]
  %v504 = vld [vmem:[%s501 + $0x10] sm:$0xff]
  %v505 = vld [vmem:[%s501 + $0x18] sm:$0xff]
  %v506 = vld [vmem:[%s501 + $0x20] sm:$0xff]
  %v507 = vld [vmem:[%s501 + $0x28] sm:$0xff]
  %v508 = vld [vmem:[%s501 + $0x30] sm:$0xff]
  %v509 = vld [vmem:[%s501 + $0x38] sm:$0xff]
  %v510 = vld [vmem:[%s501 + $0x40] sm:$0xff]
  %v511 = vld [vmem:[%s501 + $0x48] sm:$0xff]
  %v512 = vld [vmem:[%s501 + $0x50] sm:$0xff]
  %v513 = vld [vmem:[%s501 + $0x58] sm:$0xff]
  %v514 = vld [vmem:[%s501 + $0x60] sm:$0xff]
  %v515 = vld [vmem:[%s501 + $0x68] sm:$0xff]
  %v516 = vld [vmem:[%s501 + $0x70] sm:$0xff]
  %v517 = vld [vmem:[%s501 + $0x78] sm:$0xff]
  %v518 = vld [vmem:[%s501 + $0x80] sm:$0xff]
  %v519 = vld [vmem:[%s501 + $0x88] sm:$0xff]
  %v520 = vld [vmem:[%s501 + $0x90] sm:$0xff]
  %v521 = vld [vmem:[%s501 + $0x98] sm:$0xff]
  %v522 = vld [vmem:[%s501 + $0xa0] sm:$0xff]
  %v523 = vld [vmem:[%s501 + $0xa8] sm:$0xff]
  %v524 = vld [vmem:[%s501 + $0xb0] sm:$0xff]
  %v525 = vld [vmem:[%s501 + $0xb8] sm:$0xff]
  %v526 = vld [vmem:[%s501 + $0xc0] sm:$0xff]
  %v527 = vld [vmem:[%s501 + $0xc8] sm:$0xff]
  %v528 = vld [vmem:[%s501 + $0xd0] sm:$0xff]
  %v529 = vld [vmem:[%s501 + $0xd8] sm:$0xff]
  %v530 = vld [vmem:[%s501 + $0xe0] sm:$0xff]
  %v531 = vld [vmem:[%s501 + $0xe8] sm:$0xff]
  %v532 = vld [vmem:[%s501 + $0xf0] sm:$0xff]
  %v534 = vsel %vm178, %v68, 0
  %v537 = vsel %vm178, %v70, 0
  %v540 = vsel %vm178, %v72, 0
  %v543 = vsel %vm178, %v74, 0
  %v546 = vsel %vm178, %v76, 0
  %v549 = vsel %vm178, %v78, 0
  %v552 = vsel %vm178, %v80, 0
  %v555 = vsel %vm178, %v82, 0
  %v558 = vsel %vm178, %v84, 0
  %v561 = vsel %vm178, %v86, 0
  %v564 = vsel %vm178, %v88, 0
  %v567 = vsel %vm178, %v90, 0
  %569 = vmatprep.subr.mxu0 0.0
  %570 = vmatpush1.msra.mxu0 %v502
  %571 = vmatprep.subr.mxu0 0.0
  %572 = vmatpush1.msra.mxu0 %v503
  %573 = vmatprep.subr.mxu0 0.0
  %574 = vmatpush1.msra.mxu0 %v504
  %575 = vmatprep.subr.mxu0 0.0
  %576 = vmatpush1.msra.mxu0 %v505
  %577 = vmatprep.subr.mxu0 0.0
  %578 = vmatpush1.msra.mxu0 %v506
  %579 = vmatprep.subr.mxu0 0.0
  %580 = vmatpush1.msra.mxu0 %v507
  %581 = vmatprep.subr.mxu0 0.0
  %582 = vmatpush1.msra.mxu0 %v508
  %583 = vmatprep.subr.mxu0 0.0
  %584 = vmatpush1.msra.mxu0 %v509
  %585 = vmatprep.subr.mxu0 0.0
  %586 = vmatpush1.msra.mxu0 %v510
  %587 = vmatprep.subr.mxu0 0.0
  %588 = vmatpush1.msra.mxu0 %v511
  %589 = vmatprep.subr.mxu0 0.0
  %590 = vmatpush1.msra.mxu0 %v512
  %591 = vmatprep.subr.mxu0 0.0
  %592 = vmatpush1.msra.mxu0 %v513
  %593 = vmatprep.subr.mxu0 0.0
  %594 = vmatpush1.msra.mxu0 %v514
  %595 = vmatprep.subr.mxu0 0.0
  %596 = vmatpush1.msra.mxu0 %v515
  %597 = vmatprep.subr.mxu0 0.0
  %598 = vmatpush1.msra.mxu0 %v516
  %599 = vmatprep.subr.mxu0 0.0
  %600 = vmatpush1.msra.mxu0 %v517
  %601 = vmatprep.subr.mxu0 0.0
  %602 = vmatpush1.msra.mxu0 %v518
  %603 = vmatprep.subr.mxu0 0.0
  %604 = vmatpush1.msra.mxu0 %v519
  %605 = vmatprep.subr.mxu0 0.0
  %606 = vmatpush1.msra.mxu0 %v520
  %607 = vmatprep.subr.mxu0 0.0
  %608 = vmatpush1.msra.mxu0 %v521
  %609 = vmatprep.subr.mxu0 0.0
  %610 = vmatpush1.msra.mxu0 %v522
  %611 = vmatprep.subr.mxu0 0.0
  %612 = vmatpush1.msra.mxu0 %v523
  %613 = vmatprep.subr.mxu0 0.0
  %614 = vmatpush1.msra.mxu0 %v524
  %615 = vmatprep.subr.mxu0 0.0
  %616 = vmatpush1.msra.mxu0 %v525
  %617 = vmatprep.subr.mxu0 0.0
  %618 = vmatpush1.msra.mxu0 %v526
  %619 = vmatprep.subr.mxu0 0.0
  %620 = vmatpush1.msra.mxu0 %v527
  %621 = vmatprep.subr.mxu0 0.0
  %622 = vmatpush1.msra.mxu0 %v528
  %623 = vmatprep.subr.mxu0 0.0
  %624 = vmatpush1.msra.mxu0 %v529
  %625 = vmatprep.subr.mxu0 0.0
  %626 = vmatpush1.msra.mxu0 %v530
  %627 = vmatprep.subr.mxu0 0.0
  %628 = vmatpush1.msra.mxu0 %v531
  %629 = vmatprep.subr.mxu0 0.0
  %630 = vmatpush1.msra.mxu0 %v532
  %631 = vmatprep.subr.mxu0 0.0
  %632 = vmatpush1.msra.mxu0 0.0
  %633 = vmatprep.mubr.f32.mxu0 %v534
  %634 = vmatmul.mubr.f32.gmra.mrb[0].mxu0 %v67
  %v635 = vpop.f32.mrb[0].mxu0
  %v636 = vadd.f32 0.0, %v635
  %v637 = vpop.f32.mrb[0].mxu0
  %638 = vmatprep.mubr.f32.mxu0 %v537
  %639 = vmatmul.mubr.f32.gmra.mrb[0].mxu0 %v69
  %v640 = vpop.f32.mrb[0].mxu0
  %v641 = vadd.f32 0.0, %v640
  %v642 = vpop.f32.mrb[0].mxu0
  %643 = vmatprep.mubr.f32.mxu0 %v540
  %644 = vmatmul.mubr.f32.gmra.mrb[0].mxu0 %v71
  %v645 = vpop.f32.mrb[0].mxu0
  %v646 = vadd.f32 0.0, %v645
  %v647 = vpop.f32.mrb[0].mxu0
  %648 = vmatprep.mubr.f32.mxu0 %v543
  %649 = vmatmul.mubr.f32.gmra.mrb[0].mxu0 %v73
  %v650 = vpop.f32.mrb[0].mxu0
  %v651 = vadd.f32 0.0, %v650
  %v652 = vpop.f32.mrb[0].mxu0
  %653 = vmatprep.mubr.f32.mxu0 %v546
  %654 = vmatmul.mubr.f32.gmra.mrb[0].mxu0 %v75
  %v655 = vpop.f32.mrb[0].mxu0
  %v656 = vadd.f32 0.0, %v655
  %v657 = vpop.f32.mrb[0].mxu0
  %658 = vmatprep.mubr.f32.mxu0 %v549
  %659 = vmatmul.mubr.f32.gmra.mrb[0].mxu0 %v77
  %v660 = vpop.f32.mrb[0].mxu0
  %v661 = vadd.f32 0.0, %v660
  %v662 = vpop.f32.mrb[0].mxu0
  %663 = vmatprep.mubr.f32.mxu0 %v552
  %664 = vmatmul.mubr.f32.gmra.mrb[0].mxu0 %v79
  %v665 = vpop.f32.mrb[0].mxu0
  %v666 = vadd.f32 0.0, %v665
  %v667 = vpop.f32.mrb[0].mxu0
  %668 = vmatprep.mubr.f32.mxu0 %v555
  %669 = vmatmul.mubr.f32.gmra.mrb[0].mxu0 %v81
  %v670 = vpop.f32.mrb[0].mxu0
  %v671 = vadd.f32 0.0, %v670
  %v672 = vpop.f32.mrb[0].mxu0
  %673 = vmatprep.mubr.f32.mxu0 %v558
  %674 = vmatmul.mubr.f32.gmra.mrb[0].mxu0 %v83
  %v675 = vpop.f32.mrb[0].mxu0
  %v676 = vadd.f32 0.0, %v675
  %v677 = vpop.f32.mrb[0].mxu0
  %678 = vmatprep.mubr.f32.mxu0 %v561
  %679 = vmatmul.mubr.f32.gmra.mrb[0].mxu0 %v85
  %v680 = vpop.f32.mrb[0].mxu0
  %v681 = vadd.f32 0.0, %v680
  %v682 = vpop.f32.mrb[0].mxu0
  %683 = vmatprep.mubr.f32.mxu0 %v564
  %684 = vmatmul.mubr.f32.gmra.mrb[0].mxu0 %v87
  %v685 = vpop.f32.mrb[0].mxu0
  %v686 = vadd.f32 0.0, %v685
  %v687 = vpop.f32.mrb[0].mxu0
  %688 = vmatprep.mubr.f32.mxu0 %v567
  %689 = vmatmul.mubr.f32.gmra.mrb[0].mxu0 %v89
  %v690 = vpop.f32.mrb[0].mxu0
  %v691 = vadd.f32 0.0, %v690
  %v692 = vpop.f32.mrb[0].mxu0
  %693 = vdwg.mxu0
  %v694 = vadd.f32 %v443, %v636
  %v695 = vadd.f32 %v448, %v641
  %v696 = vadd.f32 %v453, %v646
  %v697 = vadd.f32 %v458, %v651
  %v698 = vadd.f32 %v463, %v656
  %v699 = vadd.f32 %v468, %v661
  %v700 = vadd.f32 %v473, %v666
  %v701 = vadd.f32 %v478, %v671
  %v702 = vadd.f32 %v483, %v676
  %v703 = vadd.f32 %v488, %v681
  %v704 = vadd.f32 %v493, %v686
  %v705 = vadd.f32 %v498, %v691
  %s706 = scalar_lea.vmem %s2, 744
  %v707 = vld [vmem:[%s706] sm:$0xff]
  %v708 = vld [vmem:[%s706 + $0x8] sm:$0xff]
  %v709 = vld [vmem:[%s706 + $0x10] sm:$0xff]
  %v710 = vld [vmem:[%s706 + $0x18] sm:$0xff]
  %v711 = vld [vmem:[%s706 + $0x20] sm:$0xff]
  %v712 = vld [vmem:[%s706 + $0x28] sm:$0xff]
  %v713 = vld [vmem:[%s706 + $0x30] sm:$0xff]
  %v714 = vld [vmem:[%s706 + $0x38] sm:$0xff]
  %v715 = vld [vmem:[%s706 + $0x40] sm:$0xff]
  %v716 = vld [vmem:[%s706 + $0x48] sm:$0xff]
  %v717 = vld [vmem:[%s706 + $0x50] sm:$0xff]
  %v718 = vld [vmem:[%s706 + $0x58] sm:$0xff]
  %v719 = vld [vmem:[%s706 + $0x60] sm:$0xff]
  %v720 = vld [vmem:[%s706 + $0x68] sm:$0xff]
  %v721 = vld [vmem:[%s706 + $0x70] sm:$0xff]
  %v722 = vld [vmem:[%s706 + $0x78] sm:$0xff]
  %v723 = vld [vmem:[%s706 + $0x80] sm:$0xff]
  %v724 = vld [vmem:[%s706 + $0x88] sm:$0xff]
  %v725 = vld [vmem:[%s706 + $0x90] sm:$0xff]
  %v726 = vld [vmem:[%s706 + $0x98] sm:$0xff]
  %v727 = vld [vmem:[%s706 + $0xa0] sm:$0xff]
  %v728 = vld [vmem:[%s706 + $0xa8] sm:$0xff]
  %v729 = vld [vmem:[%s706 + $0xb0] sm:$0xff]
  %v730 = vld [vmem:[%s706 + $0xb8] sm:$0xff]
  %v731 = vld [vmem:[%s706 + $0xc0] sm:$0xff]
  %v732 = vld [vmem:[%s706 + $0xc8] sm:$0xff]
  %v733 = vld [vmem:[%s706 + $0xd0] sm:$0xff]
  %v734 = vld [vmem:[%s706 + $0xd8] sm:$0xff]
  %v735 = vld [vmem:[%s706 + $0xe0] sm:$0xff]
  %v736 = vld [vmem:[%s706 + $0xe8] sm:$0xff]
  %v737 = vld [vmem:[%s706 + $0xf0] sm:$0xff]
  %v739 = vsel %vm178, %v92, 0
  %v742 = vsel %vm178, %v94, 0
  %v745 = vsel %vm178, %v96, 0
  %v748 = vsel %vm178, %v98, 0
  %v751 = vsel %vm178, %v100, 0
  %v754 = vsel %vm178, %v102, 0
  %v757 = vsel %vm178, %v104, 0
  %v760 = vsel %vm178, %v106, 0
  %v763 = vsel %vm178, %v108, 0
  %v766 = vsel %vm178, %v110, 0
  %v769 = vsel %vm178, %v112, 0
  %v772 = vsel %vm178, %v114, 0
  %774 = vmatprep.subr.mxu0 0.0
  %775 = vmatpush1.msra.mxu0 %v707
  %776 = vmatprep.subr.mxu0 0.0
  %777 = vmatpush1.msra.mxu0 %v708
  %778 = vmatprep.subr.mxu0 0.0
  %779 = vmatpush1.msra.mxu0 %v709
  %780 = vmatprep.subr.mxu0 0.0
  %781 = vmatpush1.msra.mxu0 %v710
  %782 = vmatprep.subr.mxu0 0.0
  %783 = vmatpush1.msra.mxu0 %v711
  %784 = vmatprep.subr.mxu0 0.0
  %785 = vmatpush1.msra.mxu0 %v712
  %786 = vmatprep.subr.mxu0 0.0
  %787 = vmatpush1.msra.mxu0 %v713
  %788 = vmatprep.subr.mxu0 0.0
  %789 = vmatpush1.msra.mxu0 %v714
  %790 = vmatprep.subr.mxu0 0.0
  %791 = vmatpush1.msra.mxu0 %v715
  %792 = vmatprep.subr.mxu0 0.0
  %793 = vmatpush1.msra.mxu0 %v716
  %794 = vmatprep.subr.mxu0 0.0
  %795 = vmatpush1.msra.mxu0 %v717
  %796 = vmatprep.subr.mxu0 0.0
  %797 = vmatpush1.msra.mxu0 %v718
  %798 = vmatprep.subr.mxu0 0.0
  %799 = vmatpush1.msra.mxu0 %v719
  %800 = vmatprep.subr.mxu0 0.0
  %801 = vmatpush1.msra.mxu0 %v720
  %802 = vmatprep.subr.mxu0 0.0
  %803 = vmatpush1.msra.mxu0 %v721
  %804 = vmatprep.subr.mxu0 0.0
  %805 = vmatpush1.msra.mxu0 %v722
  %806 = vmatprep.subr.mxu0 0.0
  %807 = vmatpush1.msra.mxu0 %v723
  %808 = vmatprep.subr.mxu0 0.0
  %809 = vmatpush1.msra.mxu0 %v724
  %810 = vmatprep.subr.mxu0 0.0
  %811 = vmatpush1.msra.mxu0 %v725
  %812 = vmatprep.subr.mxu0 0.0
  %813 = vmatpush1.msra.mxu0 %v726
  %814 = vmatprep.subr.mxu0 0.0
  %815 = vmatpush1.msra.mxu0 %v727
  %816 = vmatprep.subr.mxu0 0.0
  %817 = vmatpush1.msra.mxu0 %v728
  %818 = vmatprep.subr.mxu0 0.0
  %819 = vmatpush1.msra.mxu0 %v729
  %820 = vmatprep.subr.mxu0 0.0
  %821 = vmatpush1.msra.mxu0 %v730
  %822 = vmatprep.subr.mxu0 0.0
  %823 = vmatpush1.msra.mxu0 %v731
  %824 = vmatprep.subr.mxu0 0.0
  %825 = vmatpush1.msra.mxu0 %v732
  %826 = vmatprep.subr.mxu0 0.0
  %827 = vmatpush1.msra.mxu0 %v733
  %828 = vmatprep.subr.mxu0 0.0
  %829 = vmatpush1.msra.mxu0 %v734
  %830 = vmatprep.subr.mxu0 0.0
  %831 = vmatpush1.msra.mxu0 %v735
  %832 = vmatprep.subr.mxu0 0.0
  %833 = vmatpush1.msra.mxu0 %v736
  %834 = vmatprep.subr.mxu0 0.0
  %835 = vmatpush1.msra.mxu0 %v737
  %836 = vmatprep.subr.mxu0 0.0
  %837 = vmatpush1.msra.mxu0 0.0
  %838 = vmatprep.mubr.f32.mxu0 %v739
  %839 = vmatmul.mubr.f32.gmra.mrb[0].mxu0 %v91
  %v840 = vpop.f32.mrb[0].mxu0
  %v841 = vadd.f32 0.0, %v840
  %v842 = vpop.f32.mrb[0].mxu0
  %843 = vmatprep.mubr.f32.mxu0 %v742
  %844 = vmatmul.mubr.f32.gmra.mrb[0].mxu0 %v93
  %v845 = vpop.f32.mrb[0].mxu0
  %v846 = vadd.f32 0.0, %v845
  %v847 = vpop.f32.mrb[0].mxu0
  %848 = vmatprep.mubr.f32.mxu0 %v745
  %849 = vmatmul.mubr.f32.gmra.mrb[0].mxu0 %v95
  %v850 = vpop.f32.mrb[0].mxu0
  %v851 = vadd.f32 0.0, %v850
  %v852 = vpop.f32.mrb[0].mxu0
  %853 = vmatprep.mubr.f32.mxu0 %v748
  %854 = vmatmul.mubr.f32.gmra.mrb[0].mxu0 %v97
  %v855 = vpop.f32.mrb[0].mxu0
  %v856 = vadd.f32 0.0, %v855
  %v857 = vpop.f32.mrb[0].mxu0
  %858 = vmatprep.mubr.f32.mxu0 %v751
  %859 = vmatmul.mubr.f32.gmra.mrb[0].mxu0 %v99
  %v860 = vpop.f32.mrb[0].mxu0
  %v861 = vadd.f32 0.0, %v860
  %v862 = vpop.f32.mrb[0].mxu0
  %863 = vmatprep.mubr.f32.mxu0 %v754
  %864 = vmatmul.mubr.f32.gmra.mrb[0].mxu0 %v101
  %v865 = vpop.f32.mrb[0].mxu0
  %v866 = vadd.f32 0.0, %v865
  %v867 = vpop.f32.mrb[0].mxu0
  %868 = vmatprep.mubr.f32.mxu0 %v757
  %869 = vmatmul.mubr.f32.gmra.mrb[0].mxu0 %v103
  %v870 = vpop.f32.mrb[0].mxu0
  %v871 = vadd.f32 0.0, %v870
  %v872 = vpop.f32.mrb[0].mxu0
  %873 = vmatprep.mubr.f32.mxu0 %v760
  %874 = vmatmul.mubr.f32.gmra.mrb[0].mxu0 %v105
  %v875 = vpop.f32.mrb[0].mxu0
  %v876 = vadd.f32 0.0, %v875
  %v877 = vpop.f32.mrb[0].mxu0
  %878 = vmatprep.mubr.f32.mxu0 %v763
  %879 = vmatmul.mubr.f32.gmra.mrb[0].mxu0 %v107
  %v880 = vpop.f32.mrb[0].mxu0
  %v881 = vadd.f32 0.0, %v880
  %v882 = vpop.f32.mrb[0].mxu0
  %883 = vmatprep.mubr.f32.mxu0 %v766
  %884 = vmatmul.mubr.f32.gmra.mrb[0].mxu0 %v109
  %v885 = vpop.f32.mrb[0].mxu0
  %v886 = vadd.f32 0.0, %v885
  %v887 = vpop.f32.mrb[0].mxu0
  %888 = vmatprep.mubr.f32.mxu0 %v769
  %889 = vmatmul.mubr.f32.gmra.mrb[0].mxu0 %v111
  %v890 = vpop.f32.mrb[0].mxu0
  %v891 = vadd.f32 0.0, %v890
  %v892 = vpop.f32.mrb[0].mxu0
  %893 = vmatprep.mubr.f32.mxu0 %v772
  %894 = vmatmul.mubr.f32.gmra.mrb[0].mxu0 %v113
  %v895 = vpop.f32.mrb[0].mxu0
  %v896 = vadd.f32 0.0, %v895
  %v897 = vpop.f32.mrb[0].mxu0
  %898 = vdwg.mxu0
  %v899 = vadd.f32 %v694, %v841
  %v900 = vadd.f32 %v695, %v846
  %v901 = vadd.f32 %v696, %v851
  %v902 = vadd.f32 %v697, %v856
  %v903 = vadd.f32 %v698, %v861
  %v904 = vadd.f32 %v699, %v866
  %v905 = vadd.f32 %v700, %v871
  %v906 = vadd.f32 %v701, %v876
  %v907 = vadd.f32 %v702, %v881
  %v908 = vadd.f32 %v703, %v886
  %v909 = vadd.f32 %v704, %v891
  %v910 = vadd.f32 %v705, %v896
  %v911 = vld [vmem:[%s3] sm:$0x1]
  %v913 = vlaneseq
  %v914 = vshrl.u32 %v913, 7
  %v915 = vsub.s32 0, %v914
  %v916 = vrot.slane %v911, %v915
  %v918 = vadd.f32 %v899, %v916
  %v919 = vadd.f32 %v900, %v916
  %v920 = vadd.f32 %v901, %v916
  %v921 = vadd.f32 %v902, %v916
  %v922 = vadd.f32 %v903, %v916
  %v923 = vadd.f32 %v904, %v916
  %v924 = vadd.f32 %v905, %v916
  %v925 = vadd.f32 %v906, %v916
  %v926 = vadd.f32 %v907, %v916
  %v927 = vadd.f32 %v908, %v916
  %v928 = vadd.f32 %v909, %v916
  %v929 = vadd.f32 %v910, %v916
  %vm930 = vcmp.gt.f32.partialorder %v918, 0.0
  %vm931 = vcmp.gt.f32.partialorder %v919, 0.0
  %vm932 = vcmp.gt.f32.partialorder %v920, 0.0
  %vm933 = vcmp.gt.f32.partialorder %v921, 0.0
  %vm934 = vcmp.gt.f32.partialorder %v922, 0.0
  %vm935 = vcmp.gt.f32.partialorder %v923, 0.0
  %vm936 = vcmp.gt.f32.partialorder %v924, 0.0
  %vm937 = vcmp.gt.f32.partialorder %v925, 0.0
  %vm938 = vcmp.gt.f32.partialorder %v926, 0.0
  %vm939 = vcmp.gt.f32.partialorder %v927, 0.0
  %vm940 = vcmp.gt.f32.partialorder %v928, 0.0
  %vm941 = vcmp.gt.f32.partialorder %v929, 0.0
  %v942 = vmul.f32 %v918, -0.5
  %v943 = vmul.f32 %v919, -0.5
  %v944 = vmul.f32 %v920, -0.5
  %v945 = vmul.f32 %v921, -0.5
  %v946 = vmul.f32 %v922, -0.5
  %v947 = vmul.f32 %v923, -0.5
  %v948 = vmul.f32 %v924, -0.5
  %v949 = vmul.f32 %v925, -0.5
  %v950 = vmul.f32 %v926, -0.5
  %v951 = vmul.f32 %v927, -0.5
  %v952 = vmul.f32 %v928, -0.5
  %v953 = vmul.f32 %v929, -0.5
  %v954 = vsel %vm930, %v918, %v942
  %v955 = vsel %vm931, %v919, %v943
  %v956 = vsel %vm932, %v920, %v944
  %v957 = vsel %vm933, %v921, %v945
  %v958 = vsel %vm934, %v922, %v946
  %v959 = vsel %vm935, %v923, %v947
  %v960 = vsel %vm936, %v924, %v948
  %v961 = vsel %vm937, %v925, %v949
  %v962 = vsel %vm938, %v926, %v950
  %v963 = vsel %vm939, %v927, %v951
  %v964 = vsel %vm940, %v928, %v952
  %v965 = vsel %vm941, %v929, %v953
  %v966 = vmax.f32 %v954, -8.0
  %v967 = vmax.f32 %v955, -8.0
  %v968 = vmax.f32 %v956, -8.0
  %v969 = vmax.f32 %v957, -8.0
  %v970 = vmax.f32 %v958, -8.0
  %v971 = vmax.f32 %v959, -8.0
  %v972 = vmax.f32 %v960, -8.0
  %v973 = vmax.f32 %v961, -8.0
  %v974 = vmax.f32 %v962, -8.0
  %v975 = vmax.f32 %v963, -8.0
  %v976 = vmax.f32 %v964, -8.0
  %v977 = vmax.f32 %v965, -8.0
  %v978 = vmin.f32 %v966, 8.0
  %v979 = vmin.f32 %v967, 8.0
  %v980 = vmin.f32 %v968, 8.0
  %v981 = vmin.f32 %v969, 8.0
  %v982 = vmin.f32 %v970, 8.0
  %v983 = vmin.f32 %v971, 8.0
  %v984 = vmin.f32 %v972, 8.0
  %v985 = vmin.f32 %v973, 8.0
  %v986 = vmin.f32 %v974, 8.0
  %v987 = vmin.f32 %v975, 8.0
  %v988 = vmin.f32 %v976, 8.0
  %v989 = vmin.f32 %v977, 8.0
  %vm990 = vcmask 97280
  %v991 = vsel %vm990, %v978, 0.0
  %v992 = vsel %vm990, %v979, 0.0
  %v993 = vadd.f32 %v991, %v992
  %v994 = vsel %vm990, %v980, 0.0
  %v995 = vadd.f32 %v993, %v994
  %v996 = vsel %vm990, %v981, 0.0
  %v997 = vadd.f32 %v995, %v996
  %v998 = vsel %vm990, %v982, 0.0
  %v999 = vadd.f32 %v997, %v998
  %v1000 = vsel %vm990, %v983, 0.0
  %v1001 = vadd.f32 %v999, %v1000
  %v1002 = vrot.slane %v1001, 4
  %v1003 = vadd.f32 %v1001, %v1002
  %v1004 = vrot.slane %v1003, 2
  %v1005 = vadd.f32 %v1003, %v1004
  %v1006 = vrot.slane %v1005, 1
  %v1007 = vadd.f32 %v1005, %v1006
  %v1008 = vsel %vm990, %v984, 0.0
  %v1009 = vsel %vm990, %v985, 0.0
  %v1010 = vadd.f32 %v1008, %v1009
  %v1011 = vsel %vm990, %v986, 0.0
  %v1012 = vadd.f32 %v1010, %v1011
  %v1013 = vsel %vm990, %v987, 0.0
  %v1014 = vadd.f32 %v1012, %v1013
  %v1015 = vsel %vm990, %v988, 0.0
  %v1016 = vadd.f32 %v1014, %v1015
  %v1017 = vsel %vm990, %v989, 0.0
  %v1018 = vadd.f32 %v1016, %v1017
  %v1019 = vrot.slane %v1018, 4
  %v1020 = vadd.f32 %v1018, %v1019
  %v1021 = vrot.slane %v1020, 2
  %v1022 = vadd.f32 %v1020, %v1021
  %v1023 = vrot.slane %v1022, 1
  %v1024 = vadd.f32 %v1022, %v1023
  %vm1027 = vcmask 1041409
  %v1028 = vsel %vm1027, %v1024, %v1007
  %vm1030 = vcmask 91136
  %1031 = vst.msk [vmem:[%s4] sm:$0x3] %vm1030, %v1028
  // Predicated region
  $region18: #{model_forward.1} parent=0 // pred_check
    _
  $region19: #{model_forward.1} parent=0 // pred_check_branch
    %1033 = sbr.rel (0) target = $region21
  $region20: #{model_forward.1} parent=0 // pred_region
    _
  $region21: #{model_forward.1} parent=0 // pred_fallthru
    _
  // Predicated region
  $region22: #{model_forward.1} parent=0 // pred_check
    _
  $region23: #{model_forward.1} parent=0 // pred_check_branch
    %1035 = sbr.rel (0) target = $region25
  $region24: #{model_forward.1} parent=0 // pred_region
    _
  $region25: #{model_forward.1} parent=0 // pred_fallthru
    _

</llo_original>
